<compile_context>
chip_gen: v5e
topology: v5e:2x2
jax: 0.10.0
libtpu: 0.0.40
codegen_flags: <defaults>
</compile_context>

<pallas_src>
import math

import jax
import jax.numpy as jnp
from jax.experimental import pallas as pl
from jax.experimental.pallas import tpu as pltpu


def _cdiv(a: int, b: int) -> int:
    return (a + b - 1) // b


def _round_up(a: int, b: int) -> int:
    return _cdiv(a, b) * b


def decoder_kernel(params_ref, x_ref, out_ref, w_scr):
    """One (TM, TD) output tile.

    params_ref : (4, K_pad) f32 rows = [log|rr|, theta_adj, sin_flag, zero_flag]
    x_ref      : (K_pad, TD) f32 coefficient slab for this D tile
    out_ref    : (TM, TD)   f32 output tile
    w_scr      : (TM, K_pad) f32 VMEM scratch — cached dictionary tile
    """
    # program_id must be read OUTSIDE pl.when: cond branches cannot lower it.
    i = pl.program_id(0)   # T-tile index (outer, "parallel")
    j = pl.program_id(1)   # D-tile index (inner, "arbitrary")

    # Rebuild the dictionary tile only when we move to a new T tile.
    @pl.when(j == 0)
    def _build_dictionary():
        tm, kp = w_scr.shape
        # Integer time index t for every row of this tile.
        t = (jax.lax.broadcasted_iota(jnp.int32, (tm, kp), 0)
             + i * tm).astype(jnp.float32)                      # (TM, K_pad)

        log_mag = params_ref[0:1, :]    # (1, K_pad)  log|rr| (0 where rr == 0)
        theta   = params_ref[1:2, :]    # (1, K_pad)  theta (+pi folded for rr < 0)
        sin_row = params_ref[2:3, :]    # (1, K_pad)  1 -> sin row, 0 -> cos row
        is_zero = params_ref[3:4, :]    # (1, K_pad)  1 -> rr == 0

        # |rr|**t via exp(t * log|rr|); rr == 0 handled as 0**0 = 1, 0**t = 0.
        mag = jnp.exp(t * log_mag)
        mag = jnp.where(is_zero > 0.0, jnp.where(t == 0.0, 1.0, 0.0), mag)

        arg = t * theta
        tri = jnp.where(sin_row > 0.0, jnp.sin(arg), jnp.cos(arg))
        w_scr[...] = mag * tri

    # Hot path: one plain MXU contraction per (T, D) tile.
    out_ref[...] = jnp.dot(w_scr[...], x_ref[...],
                           preferred_element_type=jnp.float32).astype(out_ref.dtype)


def decoder_forward(rr, theta, x, T, PRE=0, *, tm_max=256, td_max=1024):
    """JAX wrapper mirroring Decoder(rr, theta, PRE, gpu_id).forward(x, T)."""
    N = rr.shape[0]
    K, D = x.shape
    assert K == 1 + 2 * N, "x rows must equal 1 + 2*len(rr)"
    T_total = T + PRE

    # ---- adaptive tiling ----------------------------------------------------
    # T axis: at least 2 tiles when T_total allows it (v7x dual-TC sharding of
    # the "parallel" axis), each tile a multiple of 8 sublanes and <= tm_max.
    n_t = max(1, _cdiv(T_total, tm_max))
    if T_total >= 16:
        n_t = max(n_t, 2)
    TM = _round_up(_cdiv(T_total, n_t), 8)
    n_t = _cdiv(T_total, TM)

    # D axis: lane-dense tiles (multiple of 128), <= td_max (~1-2 MB f32 tiles).
    n_d = max(1, _cdiv(D, td_max))
    TD = _round_up(_cdiv(D, n_d), 128)
    n_d = _cdiv(D, TD)

    # ---- pack per-dictionary-row parameters into one (4, K_pad) array -------
    K_pad = _round_up(K, 8)
    rr32 = rr.astype(jnp.float32)
    th32 = theta.astype(jnp.float32)
    rr_rows = jnp.concatenate([jnp.ones((1,), jnp.float32), rr32, rr32])       # (K,)
    th_rows = jnp.concatenate([jnp.zeros((1,), jnp.float32), th32, th32])      # (K,)
    sin_rows = jnp.concatenate([jnp.zeros((1 + N,), jnp.float32),
                                jnp.ones((N,), jnp.float32)])                  # (K,)
    is_zero = rr_rows == 0.0
    log_mag = jnp.where(is_zero, 0.0,
                        jnp.log(jnp.where(is_zero, 1.0, jnp.abs(rr_rows))))
    # rr < 0: rr**t = |rr|**t * (-1)**t, and (-1)**t folds into theta += pi.
    th_adj = th_rows + jnp.where(rr_rows < 0.0,
                                 jnp.float32(math.pi), jnp.float32(0.0))
    params = jnp.stack([log_mag, th_adj, sin_rows,
                        is_zero.astype(jnp.float32)], axis=0)                  # (4, K)
    # Padded columns: log_mag=theta=0, flags=0 -> dictionary value 1 (finite),
    # multiplied by the zero-padded x rows below -> zero contribution.
    params = jnp.pad(params, ((0, 0), (0, K_pad - K)))

    x32 = x.astype(jnp.float32)
    if K_pad != K:
        x32 = jnp.pad(x32, ((0, K_pad - K), (0, 0)))   # zero rows, tiny copy

    grid = (n_t, n_d)

    out = pl.pallas_call(
        decoder_kernel,
        out_shape=jax.ShapeDtypeStruct((T_total, D), jnp.float32),
        grid=grid,
        in_specs=[
            pl.BlockSpec((4, K_pad), lambda i, j: (0, 0)),     # packed params
            pl.BlockSpec((K_pad, TD), lambda i, j: (0, j)),    # x D-tile (full K)
        ],
        out_specs=pl.BlockSpec((TM, TD), lambda i, j: (i, j)),
        scratch_shapes=[pltpu.VMEM((TM, K_pad), jnp.float32)],
        compiler_params=pltpu.CompilerParams(
            dimension_semantics=("parallel", "arbitrary"),
            vmem_limit_bytes=32 * 1024 * 1024),
        cost_estimate=pl.CostEstimate(
            flops=2 * n_t * TM * K_pad * n_d * TD,
            transcendentals=3 * n_t * TM * K_pad,
            bytes_accessed=4 * (T_total * D + n_t * K_pad * D + 4 * K_pad)),
    )(params, x32)

    return out


def decoder_reference(rr, theta, x, T, PRE=0):
    """Pure-JAX reference of creatRealDictionary + matmul (float32)."""
    T_total = T + PRE
    i = jnp.arange(T_total, dtype=jnp.float32)[:, None]          # (T, 1)
    pw = jnp.power(rr[None, :], i)                                # (T, N)
    W1 = pw * jnp.cos(i * theta[None, :])
    W2 = pw * jnp.sin(i * theta[None, :])
    ones = jnp.ones((T_total, 1), jnp.float32)
    dic = jnp.concatenate([ones, W1, W2], axis=1)                 # (T, 1+2N)
    return dic @ x.astype(jnp.float32)


def _assert_close(out, ref, tol, name):
    # Scale-normalized max error: robust to the large dynamic range of rr**t.
    scale = float(jnp.maximum(jnp.max(jnp.abs(ref)), 1.0))
    err = float(jnp.max(jnp.abs(out - ref))) / scale
    assert err < tol, f"{name}: scaled max error {err:.3e} >= {tol:.1e}"


if __name__ == "__main__":
    key = jax.random.PRNGKey(0)
    k_rr, k_th, k_x, k_x2 = jax.random.split(key, 4)

    # --- small shapes consistent with the module ---
    N = 4            # pole pairs -> K = 1 + 2*N = 9
    T = 12           # sequence length requested at forward time
    PRE = 2          # extra prediction steps (module hyper-parameter)
    D = 32           # feature width of x (not a lane multiple -> edge masking)

    rr = jax.random.uniform(k_rr, (N,), jnp.float32, 0.90, 1.05)
    theta = jax.random.uniform(k_th, (N,), jnp.float32, 0.0, jnp.pi)
    x = jax.random.normal(k_x, (1 + 2 * N, D), jnp.float32)

    out = jax.block_until_ready(decoder_forward(rr, theta, x, T, PRE))
    ref = decoder_reference(rr, theta, x, T, PRE)
    assert out.shape == (T + PRE, D)
    _assert_close(out, ref, 1e-4, "small")

    # --- second check exercising a real grid (2 T tiles, ragged D edge) ---
    T2, PRE2, D2 = 300, 4, 700
    x2 = jax.random.normal(k_x2, (1 + 2 * N, D2), jnp.float32)
    out2 = jax.block_until_ready(decoder_forward(rr, theta, x2, T2, PRE2))
    ref2 = decoder_reference(rr, theta, x2, T2, PRE2)
    assert out2.shape == (T2 + PRE2, D2)
    _assert_close(out2, ref2, 1e-3, "tiled")

    print("KERNEL_OK")
</pallas_src>

<mosaic_0001>
module attributes {stable_mosaic.version = 11 : i64} {
  func.func @decoder_kernel(%arg0: i32, %arg1: i32, %arg2: memref<4x16xf32, #tpu.memory_space<vmem>>, %arg3: memref<16x128xf32, #tpu.memory_space<vmem>>, %arg4: memref<16x128xf32, #tpu.memory_space<vmem>>, %arg5: memref<16x16xf32, #tpu.memory_space<vmem>>) attributes {dimension_semantics = [#tpu.dimension_semantics<parallel>, #tpu.dimension_semantics<arbitrary>], iteration_bounds = array<i64: 1, 1>, scalar_prefetch = 0 : i64, scratch_operands = 1 : i64, tpu.core_type = #tpu.core_type<tc>, window_params = [{pipeline_mode = #tpu.pipeline_mode<synchronous>, transform_indices = @transform_0, window_bounds = array<i64: 4, 16>}, {transform_indices = @transform_1, window_bounds = array<i64: 16, 128>}, {transform_indices = @transform_2, window_bounds = array<i64: 16, 128>}]} {
    %c0_i32 = arith.constant 0 : i32
    %0 = arith.cmpi eq, %arg1, %c0_i32 : i32
    %1 = arith.extui %0 : i1 to i32
    %c0_i32_0 = arith.constant 0 : i32
    %2 = arith.cmpi ne, %1, %c0_i32_0 : i32
    scf.if %2 {
      %7 = tpu.iota {dimensions = array<i32: 0>} : vector<16x16xi32>
      %c16_i32 = arith.constant 16 : i32
      %8 = arith.muli %arg0, %c16_i32 : i32
      %9 = vector.broadcast %8 : i32 to vector<16x16xi32>
      %10 = arith.addi %7, %9 : vector<16x16xi32>
      %11 = arith.sitofp %10 : vector<16x16xi32> to vector<16x16xf32>
      %c0_6 = arith.constant 0 : index
      %c0_7 = arith.constant 0 : index
      %12 = vector.load %arg2[%c0_6, %c0_7] : memref<4x16xf32, #tpu.memory_space<vmem>>, vector<1x16xf32>
      %c1 = arith.constant 1 : index
      %c0_8 = arith.constant 0 : index
      %13 = vector.load %arg2[%c1, %c0_8] : memref<4x16xf32, #tpu.memory_space<vmem>>, vector<1x16xf32>
      %c2 = arith.constant 2 : index
      %c0_9 = arith.constant 0 : index
      %14 = vector.load %arg2[%c2, %c0_9] : memref<4x16xf32, #tpu.memory_space<vmem>>, vector<1x16xf32>
      %c3 = arith.constant 3 : index
      %c0_10 = arith.constant 0 : index
      %15 = vector.load %arg2[%c3, %c0_10] : memref<4x16xf32, #tpu.memory_space<vmem>>, vector<1x16xf32>
      %16 = vector.broadcast %12 : vector<1x16xf32> to vector<16x16xf32>
      %17 = arith.mulf %11, %16 : vector<16x16xf32>
      %18 = math.exp %17 : vector<16x16xf32>
      %cst_11 = arith.constant 0.000000e+00 : f32
      %19 = vector.broadcast %cst_11 : f32 to vector<1x16xf32>
      %20 = arith.cmpf ogt, %15, %19 : vector<1x16xf32>
      %cst_12 = arith.constant 0.000000e+00 : f32
      %21 = vector.broadcast %cst_12 : f32 to vector<16x16xf32>
      %22 = arith.cmpf oeq, %11, %21 : vector<16x16xf32>
      %cst_13 = arith.constant 1.000000e+00 : f32
      %cst_14 = arith.constant 0.000000e+00 : f32
      %23 = vector.broadcast %cst_13 : f32 to vector<16x16xf32>
      %24 = vector.broadcast %cst_14 : f32 to vector<16x16xf32>
      %25 = arith.select %22, %23, %24 : vector<16x16xi1>, vector<16x16xf32>
      %26 = vector.shape_cast %20 : vector<1x16xi1> to vector<1x16xi1>
      %27 = vector.broadcast %26 : vector<1x16xi1> to vector<16x16xi1>
      %28 = arith.select %27, %25, %18 : vector<16x16xi1>, vector<16x16xf32>
      %29 = vector.broadcast %13 : vector<1x16xf32> to vector<16x16xf32>
      %30 = arith.mulf %11, %29 : vector<16x16xf32>
      %cst_15 = arith.constant 0.000000e+00 : f32
      %31 = vector.broadcast %cst_15 : f32 to vector<1x16xf32>
      %32 = arith.cmpf ogt, %14, %31 : vector<1x16xf32>
      %33 = math.sin %30 : vector<16x16xf32>
      %34 = math.cos %30 : vector<16x16xf32>
      %35 = vector.shape_cast %32 : vector<1x16xi1> to vector<1x16xi1>
      %36 = vector.broadcast %35 : vector<1x16xi1> to vector<16x16xi1>
      %37 = arith.select %36, %33, %34 : vector<16x16xi1>, vector<16x16xf32>
      %38 = arith.mulf %28, %37 : vector<16x16xf32>
      %c0_16 = arith.constant 0 : index
      %c0_17 = arith.constant 0 : index
      %39 = vector.load %arg5[%c0_16, %c0_17] : memref<16x16xf32, #tpu.memory_space<vmem>>, vector<16x16xf32>
      tpu.vector_store %arg5[%c0_16, %c0_17], %38 {strides = array<i32>} : memref<16x16xf32, #tpu.memory_space<vmem>>, vector<16x16xf32>,
    } else {
    }
    %c0 = arith.constant 0 : index
    %c0_1 = arith.constant 0 : index
    %3 = vector.load %arg5[%c0, %c0_1] : memref<16x16xf32, #tpu.memory_space<vmem>>, vector<16x16xf32>
    %c0_2 = arith.constant 0 : index
    %c0_3 = arith.constant 0 : index
    %4 = vector.load %arg3[%c0_2, %c0_3] : memref<16x128xf32, #tpu.memory_space<vmem>>, vector<16x128xf32>
    %cst = arith.constant dense<0.000000e+00> : vector<16x128xf32>
    %5 = tpu.matmul %3, %4, %cst {dimension_numbers = #tpu.dot_dimension_numbers<[1], [0], [0], [1], [0, 0, 1, 1], [], []>} : vector<16x16xf32>, vector<16x128xf32>, vector<16x128xf32> -> vector<16x128xf32>
    %c0_4 = arith.constant 0 : index
    %c0_5 = arith.constant 0 : index
    %6 = vector.load %arg4[%c0_4, %c0_5] : memref<16x128xf32, #tpu.memory_space<vmem>>, vector<16x128xf32>
    tpu.vector_store %arg4[%c0_4, %c0_5], %5 {strides = array<i32>} : memref<16x128xf32, #tpu.memory_space<vmem>>, vector<16x128xf32>,
    return
  }
  func.func @transform_0(%arg0: i32, %arg1: i32) -> (i32, i32) {
    %c0_i32 = arith.constant 0 : i32
    %c0_i32_0 = arith.constant 0 : i32
    %c0_i32_1 = arith.constant 0 : i32
    return %c0_i32, %c0_i32_0 : i32, i32
  }
  func.func @transform_1(%arg0: i32, %arg1: i32) -> (i32, i32) {
    %c0_i32 = arith.constant 0 : i32
    %c0_i32_0 = arith.constant 0 : i32
    return %c0_i32, %arg1 : i32, i32
  }
  func.func @transform_2(%arg0: i32, %arg1: i32) -> (i32, i32) {
    %c0_i32 = arith.constant 0 : i32
    return %arg0, %arg1 : i32, i32
  }
}

</mosaic_0001>

<llo_original>
// kernel: tpu_custom_call.1
$region0: #{tpu_custom_call.1}
  #allocation0 [shape = 'u32[]', space=smem, size = 0x4, offset = 0x4, fixed_abs, tag = 'smem constant byte address 0x4 - core index']
  #allocation1 [shape = 'u32[72,128]{1,0:T(1,128)}', space=vmem, size = 0x9000, scoped, tag = 'internal scratch']
  #allocation2 [shape = 'f32[16,16]{1,0:T(8,128)}', space=vmem, size = 0x2000, scoped, tag = 'scratch operand']
  %s0 = inlined_call_operand.hbm [shape: f32[4,16], index: 0, kind: input, shape index: {}]
  %s1 = inlined_call_operand.hbm [shape: f32[16,32], index: 1, kind: input, shape index: {}]
  %s2 = inlined_call_operand.hbm [shape: f32[14,32], index: 2, kind: output, shape index: {}]
  %s3 = sld [smem:[#allocation0]]
  $region30: #{tpu_custom_call.1} parent=0
    _
  %s5 = ssub.s32 1, %s3
  %s6 = scalar_select 0, %s5, %s3
  $region1: #{tpu_custom_call.1} parent=0
    #allocation3 [shape = 'u8[2048]{0}', space=vmem, size = 0x800, scoped, tag = 'input window, operand 0, single buffered']
    #allocation4 [shape = 's32[1]{0}', space=sflag, size = 0x4, scoped, tag = 'scoped memory for tpu_custom_call.1']
    #allocation5 [shape = 's32[1]{0}', space=sflag, size = 0x4, scoped, tag = 'scoped memory for tpu_custom_call.1']
    #allocation6 [shape = 'u8[8192]{0}', space=vmem, size = 0x2000, scoped, tag = 'input window, operand 1, single buffered']
    #allocation7 [shape = 's32[1]{0}', space=sflag, size = 0x4, scoped, tag = 'scoped memory for tpu_custom_call.1']
    #allocation8 [shape = 'u8[8192]{0}', space=vmem, size = 0x2000, scoped, tag = 'output window, operand 0, single buffered']
    %7 = vsyncpa [#allocation4], 0
    %8 = vsyncpa [#allocation7], 0
    %9 = vsyncpa [#allocation5], 0
    // Predicated region
    $region2: #{tpu_custom_call.1} parent=1 // pred_check
      _
    $region3: #{tpu_custom_call.1} parent=1 // pred_check_branch
      %11 = sbr.rel (0) target = $region5
    $region4: #{tpu_custom_call.1} parent=1 // pred_region
      %13 = vsyncadd [#allocation4], 0
      %s15 = sshll.u32 %s0, 4
      %s16 = int_to_ptr.hbm [resolvable:$true] %s15
      %s17 = sshll.u32 [#allocation3], 4
      %s18 = int_to_ptr.vmem [resolvable:$true] %s17
      %20 = dma.hbm_to_vmem [thread:$0]  %s16, 64, %s18, [#allocation4]
    $region5: #{tpu_custom_call.1} parent=1 // pred_fallthru
      _
    // Predicated region
    $region6: #{tpu_custom_call.1} parent=1 // pred_check
      _
    $region7: #{tpu_custom_call.1} parent=1 // pred_check_branch
      %22 = sbr.rel (0) target = $region9
    $region8: #{tpu_custom_call.1} parent=1 // pred_region
      %24 = vsyncadd [#allocation7], 0
      %s25 = sshll.u32 %s1, 4
      %s26 = int_to_ptr.hbm [resolvable:$true] %s25
      %s27 = sshll.u32 [#allocation6], 4
      %s28 = int_to_ptr.vmem [resolvable:$true] %s27
      %33 = dma.hbm_to_vmem [thread:$0]  %s26, 256, %s28, [#allocation7], 128, 128, 8
    $region9: #{tpu_custom_call.1} parent=1 // pred_fallthru
      _
    // Predicated region
    $region10: #{tpu_custom_call.1} parent=1 // pred_check
      _
    $region11: #{tpu_custom_call.1} parent=1 // pred_check_branch
      %35 = sbr.rel (0) target = $region13
    $region12: #{tpu_custom_call.1} parent=1 // pred_region
      %37 = dma.done [#allocation4], 64
    $region13: #{tpu_custom_call.1} parent=1 // pred_fallthru
      _
    // Predicated region
    $region14: #{tpu_custom_call.1} parent=1 // pred_check
      _
    $region15: #{tpu_custom_call.1} parent=1 // pred_check_branch
      %39 = sbr.rel (0) target = $region17
    $region16: #{tpu_custom_call.1} parent=1 // pred_region
      %41 = dma.done [#allocation7], 256
    $region17: #{tpu_custom_call.1} parent=1 // pred_fallthru
      _
    %p42 = scmp.eq.s32.totalorder 0, 0
    // Predicated region
    $region18: #{tpu_custom_call.1} parent=1 // pred_check
      %p43 = pneg %p42
    $region19: #{tpu_custom_call.1} parent=1 // pred_check_branch
      %45 = sbr.rel (%p43) target = $region21
    $region20: #{tpu_custom_call.1} parent=1 // pred_region
      %v46 = vlaneseq
      %v47 = vshrl.u32 %v46, 7
      %v48 = vadd.s32 %v47, 8
      %s49 = smul.u32 0, 16
      %v50 = vstv %s49
      %v51 = vadd.s32 %v47, %v50
      %v52 = vadd.s32 %v48, %v50
      %v53 = vcvt.s32.f32 %v51
      %v54 = vcvt.s32.f32 %v52
      %v55 = vld [vmem:[#allocation3] sm:$0x1]
      %v56 = vld [vmem:[#allocation3 + $0x1] sm:$0x1]
      %v57 = vld [vmem:[#allocation3 + $0x2] sm:$0x1]
      %v58 = vld [vmem:[#allocation3 + $0x3] sm:$0x1]
      %v59 = vperm.slane %v55, 0
      %v60 = vmul.f32 %v53, %v59
      %v61 = vmul.f32 %v54, %v59
      %v62 = vmul.f32 %v60, 1.442695
      %v63 = vpow.pop %v62
      %v64 = vmul.f32 %v61, 1.442695
      %v65 = vpow.pop %v64
      %vm66 = vcmp.gt.f32.partialorder %v58, 0.0
      %vm67 = vcmp.eq.f32.partialorder %v53, 0.0
      %vm68 = vcmp.eq.f32.partialorder %v54, 0.0
      %v69 = vsel %vm67, 1.0, 0.0
      %v70 = vsel %vm68, 1.0, 0.0
      %v71 = vsel %vm66, 1, 0
      %v72 = vperm.slane %v71, 0
      %vm73 = vcmp.eq.s32.totalorder %v72, 1
      %v74 = vsel %vm73, %v69, %v63
      %v75 = vsel %vm73, %v70, %v65
      %v76 = vperm.slane %v56, 0
      %v77 = vmul.f32 %v53, %v76
      %v78 = vmul.f32 %v54, %v76
      %vm79 = vcmp.gt.f32.partialorder %v57, 0.0
      %v80 = vand.u32 2147483647, %v77
      %vm81 = vcmp.le.f32.partialorder %v80, 0.7853982
      %vm82 = vcmp.lt.s32.totalorder %v77, 0
      %v83 = vand.u32 %v77, 2139095040
      %v84 = vshrl.u32 %v83, 23
      %v85 = vsub.s32 %v84, 127
      %v86 = vand.u32 2147483647, %v77
      %v87 = vand.u32 %v86, 8388607
      %v88 = vor.u32 %v87, 8388608
      %v89 = vsub.s32 0, %v88
      %v90 = vadd.s32 %v85, 1
      %vm91 = vcmp.gt.s32.totalorder %v90, 0
      %v92 = vsel %vm91, %v90, 0
      %v93 = vshrl.u32 %v92, 5
      %v94 = vand.u32 %v92, 31
      %v95 = vsub.s32 32, %v94
      %v96 = vshrl.u32 683565275, %v95
      %v97 = vshll.u32 683565275, %v94
      %v98 = vshrl.u32 2475754826, %v95
      %v99 = vor.u32 %v97, %v98
      %v100 = vshll.u32 2475754826, %v94
      %v101 = vshrl.u32 2131351028, %v95
      %v102 = vor.u32 %v100, %v101
      %v103 = vshll.u32 2131351028, %v94
      %v104 = vshrl.u32 2102212464, %v95
      %v105 = vor.u32 %v103, %v104
      %v106 = vshll.u32 2102212464, %v94
      %v107 = vshrl.u32 920167782, %v95
      %v108 = vor.u32 %v106, %v107
      %v109 = vshll.u32 920167782, %v94
      %v110 = vshrl.u32 1326507024, %v95
      %v111 = vor.u32 %v109, %v110
      %vm112 = vcmp.lt.s32.totalorder %v93, 1
      %vm113 = vcmp.lt.s32.totalorder %v93, 2
      %vm114 = vcmp.lt.s32.totalorder %v93, 3
      %vm115 = vcmp.lt.s32.totalorder %v93, 4
      %v116 = vsel %vm112, %v96, %v99
      %v117 = vsel %vm115, %v105, 2102212464
      %v118 = vsel %vm114, %v102, %v117
      %v119 = vsel %vm113, %v116, %v118
      %v120 = vsel %vm112, %v99, %v102
      %v121 = vsel %vm115, %v108, 920167782
      %v122 = vsel %vm114, %v105, %v121
      %v123 = vsel %vm113, %v120, %v122
      %v124 = vsel %vm112, %v102, %v105
      %v125 = vsel %vm115, %v111, 1326507024
      %v126 = vsel %vm114, %v108, %v125
      %v127 = vsel %vm113, %v124, %v126
      %v128 = vshll.u32 %v88, 8
      %v129 = vand.u32 %v128, 65535
      %v130 = vshrl.u32 %v128, 16
      %v131 = vand.u32 %v127, 65535
      %v132 = vshrl.u32 %v127, 16
      %v133 = vmul.u32 %v129, %v131
      %v134 = vmul.u32 %v129, %v132
      %v135 = vmul.u32 %v130, %v131
      %v136 = vmul.u32 %v130, %v132
      %v137 = vshll.u32 %v134, 16
      %v138 = vshrl.u32 %v134, 16
      %v139 = vshll.u32 %v135, 16
      %v140 = vshrl.u32 %v135, 16
      %vm141 = vc.u32 %v133, %v137
      %v142 = vsel %vm141, 1, 0
      %v143 = vadd.s32 %v133, %v137
      %v144 = vadd.s32 %v136, %v142
      %vm145 = vc.u32 %v143, %v139
      %v146 = vsel %vm145, 1, 0
      %v147 = vadd.s32 %v143, %v139
      %v148 = vadd.s32 %v144, %v146
      %v149 = vadd.s32 %v148, %v138
      %v150 = vadd.s32 %v149, %v140
      %v151 = vand.u32 %v128, 65535
      %v152 = vshrl.u32 %v128, 16
      %v153 = vand.u32 %v123, 65535
      %v154 = vshrl.u32 %v123, 16
      %v155 = vmul.u32 %v151, %v153
      %v156 = vmul.u32 %v151, %v154
      %v157 = vmul.u32 %v152, %v153
      %v158 = vmul.u32 %v152, %v154
      %v159 = vshll.u32 %v156, 16
      %v160 = vshrl.u32 %v156, 16
      %v161 = vshll.u32 %v157, 16
      %v162 = vshrl.u32 %v157, 16
      %vm163 = vc.u32 %v155, %v159
      %v164 = vsel %vm163, 1, 0
      %v165 = vadd.s32 %v155, %v159
      %v166 = vadd.s32 %v158, %v164
      %vm167 = vc.u32 %v165, %v161
      %v168 = vsel %vm167, 1, 0
      %v169 = vadd.s32 %v165, %v161
      %v170 = vadd.s32 %v166, %v168
      %v171 = vadd.s32 %v170, %v160
      %v172 = vadd.s32 %v171, %v162
      %v173 = vmul.u32 %v128, %v119
      %v174 = vadd.s32 %v150, %v169
      %vm175 = vc.u32 %v150, %v169
      %v176 = vadd.s32 %v172, 1
      %v177 = vsel %vm175, %v176, %v172
      %v178 = vadd.s32 %v173, %v177
      %v179 = vadd.s32 %v178, 536870912
      %v180 = vshrl.u32 %v179, 30
      %v181 = vshll.u32 %v180, 30
      %v182 = vsub.s32 %v178, %v181
      %vm183 = vcmp.lt.s32.totalorder %v182, 0
      %v184 = vsub.s32 0, %v182
      %v185 = vsel %vm183, %v184, %v182
      %v186 = vclz %v185
      %v187 = vsub.s32 %v186, 2
      %vm188 = vcmp.gt.s32.totalorder 0, %v187
      %v189 = vsel %vm188, 0, %v187
      %v190 = vsub.s32 32, %v189
      %v191 = vshll.u32 %v182, %v189
      %v192 = vshrl.u32 %v174, %v190
      %v193 = vor.u32 %v191, %v192
      %v194 = vsub.s32 4294967266, %v189
      %v195 = vadd.s32 %v194, 127
      %v196 = vshll.u32 %v195, 23
      %v197 = vor.u32 4788187, %v196
      %v198 = vand.u32 2147483647, %v197
      %v200 = vcvt.s32.f32 %v193
      %v201 = vmul.f32 %v200, %v198
      %v202 = vxor.u32 %v201, 2147483648
      %v203 = vsel %vm82, %v202, %v201
      %v204 = vsub.s32 4, %v180
      %v205 = vsel %vm82, %v204, %v180
      %v206 = vsel %vm81, %v77, %v203
      %v207 = vsel %vm81, 0, %v205
      %v208 = vmul.f32 %v206, %v206
      %v209 = vmul.f32 %v208, -0.001358992
      %v210 = vadd.f32 %v209, 0.041655596
      %v211 = vmul.f32 %v208, %v210
      %v212 = vadd.f32 %v211, -0.4999988
      %v213 = vmul.f32 %v208, %v212
      %v214 = vadd.f32 1.0, %v213
      %v215 = vmul.f32 %v206, %v206
      %v216 = vmul.f32 %v215, -0.00019511016
      %v217 = vadd.f32 %v216, 0.008332121
      %v218 = vmul.f32 %v215, %v217
      %v219 = vadd.f32 %v218, -0.16666654
      %v220 = vmul.f32 %v215, %v219
      %v221 = vadd.f32 %v220, 1.0
      %v222 = vmul.f32 %v221, %v206
      %vm223 = vweird.f32 %v77
      %v224 = vadd.s32 %v207, 3
      %v225 = vand.u32 %v224, 3
      %vm226 = vcmp.lt.s32.totalorder %v225, 2
      %vm227 = vcmp.eq.s32.totalorder %v225, 0
      %v228 = vxor.u32 %v222, 2147483648
      %v229 = vsel %vm227, %v214, %v228
      %vm230 = vcmp.eq.s32.totalorder %v225, 2
      %v231 = vxor.u32 %v214, 2147483648
      %v232 = vsel %vm230, %v231, %v222
      %v233 = vsel %vm226, %v229, %v232
      %v234 = vsel %vm223, nan, %v233
      %v235 = vand.u32 2147483647, %v78
      %vm236 = vcmp.le.f32.partialorder %v235, 0.7853982
      %vm237 = vcmp.lt.s32.totalorder %v78, 0
      %v238 = vand.u32 %v78, 2139095040
      %v239 = vshrl.u32 %v238, 23
      %v240 = vsub.s32 %v239, 127
      %v241 = vand.u32 2147483647, %v78
      %v242 = vand.u32 %v241, 8388607
      %v243 = vor.u32 %v242, 8388608
      %v244 = vsub.s32 0, %v243
      %v245 = vadd.s32 %v240, 1
      %vm246 = vcmp.gt.s32.totalorder %v245, 0
      %v247 = vsel %vm246, %v245, 0
      %v248 = vshrl.u32 %v247, 5
      %v249 = vand.u32 %v247, 31
      %v250 = vsub.s32 32, %v249
      %v251 = vshrl.u32 683565275, %v250
      %v252 = vshll.u32 683565275, %v249
      %v253 = vshrl.u32 2475754826, %v250
      %v254 = vor.u32 %v252, %v253
      %v255 = vshll.u32 2475754826, %v249
      %v256 = vshrl.u32 2131351028, %v250
      %v257 = vor.u32 %v255, %v256
      %v258 = vshll.u32 2131351028, %v249
      %v259 = vshrl.u32 2102212464, %v250
      %v260 = vor.u32 %v258, %v259
      %v261 = vshll.u32 2102212464, %v249
      %v262 = vshrl.u32 920167782, %v250
      %v263 = vor.u32 %v261, %v262
      %v264 = vshll.u32 920167782, %v249
      %v265 = vshrl.u32 1326507024, %v250
      %v266 = vor.u32 %v264, %v265
      %vm267 = vcmp.lt.s32.totalorder %v248, 1
      %vm268 = vcmp.lt.s32.totalorder %v248, 2
      %vm269 = vcmp.lt.s32.totalorder %v248, 3
      %vm270 = vcmp.lt.s32.totalorder %v248, 4
      %v271 = vsel %vm267, %v251, %v254
      %v272 = vsel %vm270, %v260, 2102212464
      %v273 = vsel %vm269, %v257, %v272
      %v274 = vsel %vm268, %v271, %v273
      %v275 = vsel %vm267, %v254, %v257
      %v276 = vsel %vm270, %v263, 920167782
      %v277 = vsel %vm269, %v260, %v276
      %v278 = vsel %vm268, %v275, %v277
      %v279 = vsel %vm267, %v257, %v260
      %v280 = vsel %vm270, %v266, 1326507024
      %v281 = vsel %vm269, %v263, %v280
      %v282 = vsel %vm268, %v279, %v281
      %v283 = vshll.u32 %v243, 8
      %v284 = vand.u32 %v283, 65535
      %v285 = vshrl.u32 %v283, 16
      %v286 = vand.u32 %v282, 65535
      %v287 = vshrl.u32 %v282, 16
      %v288 = vmul.u32 %v284, %v286
      %v289 = vmul.u32 %v284, %v287
      %v290 = vmul.u32 %v285, %v286
      %v291 = vmul.u32 %v285, %v287
      %v292 = vshll.u32 %v289, 16
      %v293 = vshrl.u32 %v289, 16
      %v294 = vshll.u32 %v290, 16
      %v295 = vshrl.u32 %v290, 16
      %vm296 = vc.u32 %v288, %v292
      %v297 = vsel %vm296, 1, 0
      %v298 = vadd.s32 %v288, %v292
      %v299 = vadd.s32 %v291, %v297
      %vm300 = vc.u32 %v298, %v294
      %v301 = vsel %vm300, 1, 0
      %v302 = vadd.s32 %v298, %v294
      %v303 = vadd.s32 %v299, %v301
      %v304 = vadd.s32 %v303, %v293
      %v305 = vadd.s32 %v304, %v295
      %v306 = vand.u32 %v283, 65535
      %v307 = vshrl.u32 %v283, 16
      %v308 = vand.u32 %v278, 65535
      %v309 = vshrl.u32 %v278, 16
      %v310 = vmul.u32 %v306, %v308
      %v311 = vmul.u32 %v306, %v309
      %v312 = vmul.u32 %v307, %v308
      %v313 = vmul.u32 %v307, %v309
      %v314 = vshll.u32 %v311, 16
      %v315 = vshrl.u32 %v311, 16
      %v316 = vshll.u32 %v312, 16
      %v317 = vshrl.u32 %v312, 16
      %vm318 = vc.u32 %v310, %v314
      %v319 = vsel %vm318, 1, 0
      %v320 = vadd.s32 %v310, %v314
      %v321 = vadd.s32 %v313, %v319
      %vm322 = vc.u32 %v320, %v316
      %v323 = vsel %vm322, 1, 0
      %v324 = vadd.s32 %v320, %v316
      %v325 = vadd.s32 %v321, %v323
      %v326 = vadd.s32 %v325, %v315
      %v327 = vadd.s32 %v326, %v317
      %v328 = vmul.u32 %v283, %v274
      %v329 = vadd.s32 %v305, %v324
      %vm330 = vc.u32 %v305, %v324
      %v331 = vadd.s32 %v327, 1
      %v332 = vsel %vm330, %v331, %v327
      %v333 = vadd.s32 %v328, %v332
      %v334 = vadd.s32 %v333, 536870912
      %v335 = vshrl.u32 %v334, 30
      %v336 = vshll.u32 %v335, 30
      %v337 = vsub.s32 %v333, %v336
      %vm338 = vcmp.lt.s32.totalorder %v337, 0
      %v339 = vsub.s32 0, %v337
      %v340 = vsel %vm338, %v339, %v337
      %v341 = vclz %v340
      %v342 = vsub.s32 %v341, 2
      %vm343 = vcmp.gt.s32.totalorder 0, %v342
      %v344 = vsel %vm343, 0, %v342
      %v345 = vsub.s32 32, %v344
      %v346 = vshll.u32 %v337, %v344
      %v347 = vshrl.u32 %v329, %v345
      %v348 = vor.u32 %v346, %v347
      %v349 = vsub.s32 4294967266, %v344
      %v350 = vadd.s32 %v349, 127
      %v351 = vshll.u32 %v350, 23
      %v352 = vor.u32 4788187, %v351
      %v353 = vand.u32 2147483647, %v352
      %v355 = vcvt.s32.f32 %v348
      %v356 = vmul.f32 %v355, %v353
      %v357 = vxor.u32 %v356, 2147483648
      %v358 = vsel %vm237, %v357, %v356
      %v359 = vsub.s32 4, %v335
      %v360 = vsel %vm237, %v359, %v335
      %v361 = vsel %vm236, %v78, %v358
      %v362 = vsel %vm236, 0, %v360
      %v363 = vmul.f32 %v361, %v361
      %v364 = vmul.f32 %v363, -0.001358992
      %v365 = vadd.f32 %v364, 0.041655596
      %v366 = vmul.f32 %v363, %v365
      %v367 = vadd.f32 %v366, -0.4999988
      %v368 = vmul.f32 %v363, %v367
      %v369 = vadd.f32 1.0, %v368
      %v370 = vmul.f32 %v361, %v361
      %v371 = vmul.f32 %v370, -0.00019511016
      %v372 = vadd.f32 %v371, 0.008332121
      %v373 = vmul.f32 %v370, %v372
      %v374 = vadd.f32 %v373, -0.16666654
      %v375 = vmul.f32 %v370, %v374
      %v376 = vadd.f32 %v375, 1.0
      %v377 = vmul.f32 %v376, %v361
      %vm378 = vweird.f32 %v78
      %v379 = vadd.s32 %v362, 3
      %v380 = vand.u32 %v379, 3
      %vm381 = vcmp.lt.s32.totalorder %v380, 2
      %vm382 = vcmp.eq.s32.totalorder %v380, 0
      %v383 = vxor.u32 %v377, 2147483648
      %v384 = vsel %vm382, %v369, %v383
      %vm385 = vcmp.eq.s32.totalorder %v380, 2
      %v386 = vxor.u32 %v369, 2147483648
      %v387 = vsel %vm385, %v386, %v377
      %v388 = vsel %vm381, %v384, %v387
      %v389 = vsel %vm378, nan, %v388
      %v390 = vand.u32 2147483647, %v77
      %vm391 = vcmp.le.f32.partialorder %v390, 0.7853982
      %vm392 = vcmp.lt.s32.totalorder %v77, 0
      %v393 = vand.u32 %v77, 2139095040
      %v394 = vshrl.u32 %v393, 23
      %v395 = vsub.s32 %v394, 127
      %v396 = vand.u32 2147483647, %v77
      %v397 = vand.u32 %v396, 8388607
      %v398 = vor.u32 %v397, 8388608
      %v399 = vsub.s32 0, %v398
      %v400 = vadd.s32 %v395, 1
      %vm401 = vcmp.gt.s32.totalorder %v400, 0
      %v402 = vsel %vm401, %v400, 0
      %v403 = vshrl.u32 %v402, 5
      %v404 = vand.u32 %v402, 31
      %v405 = vsub.s32 32, %v404
      %v406 = vshrl.u32 683565275, %v405
      %v407 = vshll.u32 683565275, %v404
      %v408 = vshrl.u32 2475754826, %v405
      %v409 = vor.u32 %v407, %v408
      %v410 = vshll.u32 2475754826, %v404
      %v411 = vshrl.u32 2131351028, %v405
      %v412 = vor.u32 %v410, %v411
      %v413 = vshll.u32 2131351028, %v404
      %v414 = vshrl.u32 2102212464, %v405
      %v415 = vor.u32 %v413, %v414
      %v416 = vshll.u32 2102212464, %v404
      %v417 = vshrl.u32 920167782, %v405
      %v418 = vor.u32 %v416, %v417
      %v419 = vshll.u32 920167782, %v404
      %v420 = vshrl.u32 1326507024, %v405
      %v421 = vor.u32 %v419, %v420
      %vm422 = vcmp.lt.s32.totalorder %v403, 1
      %vm423 = vcmp.lt.s32.totalorder %v403, 2
      %vm424 = vcmp.lt.s32.totalorder %v403, 3
      %vm425 = vcmp.lt.s32.totalorder %v403, 4
      %v426 = vsel %vm422, %v406, %v409
      %v427 = vsel %vm425, %v415, 2102212464
      %v428 = vsel %vm424, %v412, %v427
      %v429 = vsel %vm423, %v426, %v428
      %v430 = vsel %vm422, %v409, %v412
      %v431 = vsel %vm425, %v418, 920167782
      %v432 = vsel %vm424, %v415, %v431
      %v433 = vsel %vm423, %v430, %v432
      %v434 = vsel %vm422, %v412, %v415
      %v435 = vsel %vm425, %v421, 1326507024
      %v436 = vsel %vm424, %v418, %v435
      %v437 = vsel %vm423, %v434, %v436
      %v438 = vshll.u32 %v398, 8
      %v439 = vand.u32 %v438, 65535
      %v440 = vshrl.u32 %v438, 16
      %v441 = vand.u32 %v437, 65535
      %v442 = vshrl.u32 %v437, 16
      %v443 = vmul.u32 %v439, %v441
      %v444 = vmul.u32 %v439, %v442
      %v445 = vmul.u32 %v440, %v441
      %v446 = vmul.u32 %v440, %v442
      %v447 = vshll.u32 %v444, 16
      %v448 = vshrl.u32 %v444, 16
      %v449 = vshll.u32 %v445, 16
      %v450 = vshrl.u32 %v445, 16
      %vm451 = vc.u32 %v443, %v447
      %v452 = vsel %vm451, 1, 0
      %v453 = vadd.s32 %v443, %v447
      %v454 = vadd.s32 %v446, %v452
      %vm455 = vc.u32 %v453, %v449
      %v456 = vsel %vm455, 1, 0
      %v457 = vadd.s32 %v453, %v449
      %v458 = vadd.s32 %v454, %v456
      %v459 = vadd.s32 %v458, %v448
      %v460 = vadd.s32 %v459, %v450
      %v461 = vand.u32 %v438, 65535
      %v462 = vshrl.u32 %v438, 16
      %v463 = vand.u32 %v433, 65535
      %v464 = vshrl.u32 %v433, 16
      %v465 = vmul.u32 %v461, %v463
      %v466 = vmul.u32 %v461, %v464
      %v467 = vmul.u32 %v462, %v463
      %v468 = vmul.u32 %v462, %v464
      %v469 = vshll.u32 %v466, 16
      %v470 = vshrl.u32 %v466, 16
      %v471 = vshll.u32 %v467, 16
      %v472 = vshrl.u32 %v467, 16
      %vm473 = vc.u32 %v465, %v469
      %v474 = vsel %vm473, 1, 0
      %v475 = vadd.s32 %v465, %v469
      %v476 = vadd.s32 %v468, %v474
      %vm477 = vc.u32 %v475, %v471
      %v478 = vsel %vm477, 1, 0
      %v479 = vadd.s32 %v475, %v471
      %v480 = vadd.s32 %v476, %v478
      %v481 = vadd.s32 %v480, %v470
      %v482 = vadd.s32 %v481, %v472
      %v483 = vmul.u32 %v438, %v429
      %v484 = vadd.s32 %v460, %v479
      %vm485 = vc.u32 %v460, %v479
      %v486 = vadd.s32 %v482, 1
      %v487 = vsel %vm485, %v486, %v482
      %v488 = vadd.s32 %v483, %v487
      %v489 = vadd.s32 %v488, 536870912
      %v490 = vshrl.u32 %v489, 30
      %v491 = vshll.u32 %v490, 30
      %v492 = vsub.s32 %v488, %v491
      %vm493 = vcmp.lt.s32.totalorder %v492, 0
      %v494 = vsub.s32 0, %v492
      %v495 = vsel %vm493, %v494, %v492
      %v496 = vclz %v495
      %v497 = vsub.s32 %v496, 2
      %vm498 = vcmp.gt.s32.totalorder 0, %v497
      %v499 = vsel %vm498, 0, %v497
      %v500 = vsub.s32 32, %v499
      %v501 = vshll.u32 %v492, %v499
      %v502 = vshrl.u32 %v484, %v500
      %v503 = vor.u32 %v501, %v502
      %v504 = vsub.s32 4294967266, %v499
      %v505 = vadd.s32 %v504, 127
      %v506 = vshll.u32 %v505, 23
      %v507 = vor.u32 4788187, %v506
      %v508 = vand.u32 2147483647, %v507
      %v510 = vcvt.s32.f32 %v503
      %v511 = vmul.f32 %v510, %v508
      %v512 = vxor.u32 %v511, 2147483648
      %v513 = vsel %vm392, %v512, %v511
      %v514 = vsub.s32 4, %v490
      %v515 = vsel %vm392, %v514, %v490
      %v516 = vsel %vm391, %v77, %v513
      %v517 = vsel %vm391, 0, %v515
      %v518 = vmul.f32 %v516, %v516
      %v519 = vmul.f32 %v518, -0.001358992
      %v520 = vadd.f32 %v519, 0.041655596
      %v521 = vmul.f32 %v518, %v520
      %v522 = vadd.f32 %v521, -0.4999988
      %v523 = vmul.f32 %v518, %v522
      %v524 = vadd.f32 1.0, %v523
      %v525 = vmul.f32 %v516, %v516
      %v526 = vmul.f32 %v525, -0.00019511016
      %v527 = vadd.f32 %v526, 0.008332121
      %v528 = vmul.f32 %v525, %v527
      %v529 = vadd.f32 %v528, -0.16666654
      %v530 = vmul.f32 %v525, %v529
      %v531 = vadd.f32 %v530, 1.0
      %v532 = vmul.f32 %v531, %v516
      %vm533 = vweird.f32 %v77
      %v534 = vand.u32 %v517, 3
      %vm535 = vcmp.lt.s32.totalorder %v534, 2
      %vm536 = vcmp.eq.s32.totalorder %v534, 0
      %v537 = vxor.u32 %v532, 2147483648
      %v538 = vsel %vm536, %v524, %v537
      %vm539 = vcmp.eq.s32.totalorder %v534, 2
      %v540 = vxor.u32 %v524, 2147483648
      %v541 = vsel %vm539, %v540, %v532
      %v542 = vsel %vm535, %v538, %v541
      %v543 = vsel %vm533, nan, %v542
      %v544 = vand.u32 2147483647, %v78
      %vm545 = vcmp.le.f32.partialorder %v544, 0.7853982
      %vm546 = vcmp.lt.s32.totalorder %v78, 0
      %v547 = vand.u32 %v78, 2139095040
      %v548 = vshrl.u32 %v547, 23
      %v549 = vsub.s32 %v548, 127
      %v550 = vand.u32 2147483647, %v78
      %v551 = vand.u32 %v550, 8388607
      %v552 = vor.u32 %v551, 8388608
      %v553 = vsub.s32 0, %v552
      %v554 = vadd.s32 %v549, 1
      %vm555 = vcmp.gt.s32.totalorder %v554, 0
      %v556 = vsel %vm555, %v554, 0
      %v557 = vshrl.u32 %v556, 5
      %v558 = vand.u32 %v556, 31
      %v559 = vsub.s32 32, %v558
      %v560 = vshrl.u32 683565275, %v559
      %v561 = vshll.u32 683565275, %v558
      %v562 = vshrl.u32 2475754826, %v559
      %v563 = vor.u32 %v561, %v562
      %v564 = vshll.u32 2475754826, %v558
      %v565 = vshrl.u32 2131351028, %v559
      %v566 = vor.u32 %v564, %v565
      %v567 = vshll.u32 2131351028, %v558
      %v568 = vshrl.u32 2102212464, %v559
      %v569 = vor.u32 %v567, %v568
      %v570 = vshll.u32 2102212464, %v558
      %v571 = vshrl.u32 920167782, %v559
      %v572 = vor.u32 %v570, %v571
      %v573 = vshll.u32 920167782, %v558
      %v574 = vshrl.u32 1326507024, %v559
      %v575 = vor.u32 %v573, %v574
      %vm576 = vcmp.lt.s32.totalorder %v557, 1
      %vm577 = vcmp.lt.s32.totalorder %v557, 2
      %vm578 = vcmp.lt.s32.totalorder %v557, 3
      %vm579 = vcmp.lt.s32.totalorder %v557, 4
      %v580 = vsel %vm576, %v560, %v563
      %v581 = vsel %vm579, %v569, 2102212464
      %v582 = vsel %vm578, %v566, %v581
      %v583 = vsel %vm577, %v580, %v582
      %v584 = vsel %vm576, %v563, %v566
      %v585 = vsel %vm579, %v572, 920167782
      %v586 = vsel %vm578, %v569, %v585
      %v587 = vsel %vm577, %v584, %v586
      %v588 = vsel %vm576, %v566, %v569
      %v589 = vsel %vm579, %v575, 1326507024
      %v590 = vsel %vm578, %v572, %v589
      %v591 = vsel %vm577, %v588, %v590
      %v592 = vshll.u32 %v552, 8
      %v593 = vand.u32 %v592, 65535
      %v594 = vshrl.u32 %v592, 16
      %v595 = vand.u32 %v591, 65535
      %v596 = vshrl.u32 %v591, 16
      %v597 = vmul.u32 %v593, %v595
      %v598 = vmul.u32 %v593, %v596
      %v599 = vmul.u32 %v594, %v595
      %v600 = vmul.u32 %v594, %v596
      %v601 = vshll.u32 %v598, 16
      %v602 = vshrl.u32 %v598, 16
      %v603 = vshll.u32 %v599, 16
      %v604 = vshrl.u32 %v599, 16
      %vm605 = vc.u32 %v597, %v601
      %v606 = vsel %vm605, 1, 0
      %v607 = vadd.s32 %v597, %v601
      %v608 = vadd.s32 %v600, %v606
      %vm609 = vc.u32 %v607, %v603
      %v610 = vsel %vm609, 1, 0
      %v611 = vadd.s32 %v607, %v603
      %v612 = vadd.s32 %v608, %v610
      %v613 = vadd.s32 %v612, %v602
      %v614 = vadd.s32 %v613, %v604
      %v615 = vand.u32 %v592, 65535
      %v616 = vshrl.u32 %v592, 16
      %v617 = vand.u32 %v587, 65535
      %v618 = vshrl.u32 %v587, 16
      %v619 = vmul.u32 %v615, %v617
      %v620 = vmul.u32 %v615, %v618
      %v621 = vmul.u32 %v616, %v617
      %v622 = vmul.u32 %v616, %v618
      %v623 = vshll.u32 %v620, 16
      %v624 = vshrl.u32 %v620, 16
      %v625 = vshll.u32 %v621, 16
      %v626 = vshrl.u32 %v621, 16
      %vm627 = vc.u32 %v619, %v623
      %v628 = vsel %vm627, 1, 0
      %v629 = vadd.s32 %v619, %v623
      %v630 = vadd.s32 %v622, %v628
      %vm631 = vc.u32 %v629, %v625
      %v632 = vsel %vm631, 1, 0
      %v633 = vadd.s32 %v629, %v625
      %v634 = vadd.s32 %v630, %v632
      %v635 = vadd.s32 %v634, %v624
      %v636 = vadd.s32 %v635, %v626
      %v637 = vmul.u32 %v592, %v583
      %v638 = vadd.s32 %v614, %v633
      %vm639 = vc.u32 %v614, %v633
      %v640 = vadd.s32 %v636, 1
      %v641 = vsel %vm639, %v640, %v636
      %v642 = vadd.s32 %v637, %v641
      %v643 = vadd.s32 %v642, 536870912
      %v644 = vshrl.u32 %v643, 30
      %v645 = vshll.u32 %v644, 30
      %v646 = vsub.s32 %v642, %v645
      %vm647 = vcmp.lt.s32.totalorder %v646, 0
      %v648 = vsub.s32 0, %v646
      %v649 = vsel %vm647, %v648, %v646
      %v650 = vclz %v649
      %v651 = vsub.s32 %v650, 2
      %vm652 = vcmp.gt.s32.totalorder 0, %v651
      %v653 = vsel %vm652, 0, %v651
      %v654 = vsub.s32 32, %v653
      %v655 = vshll.u32 %v646, %v653
      %v656 = vshrl.u32 %v638, %v654
      %v657 = vor.u32 %v655, %v656
      %v658 = vsub.s32 4294967266, %v653
      %v659 = vadd.s32 %v658, 127
      %v660 = vshll.u32 %v659, 23
      %v661 = vor.u32 4788187, %v660
      %v662 = vand.u32 2147483647, %v661
      %v664 = vcvt.s32.f32 %v657
      %v665 = vmul.f32 %v664, %v662
      %v666 = vxor.u32 %v665, 2147483648
      %v667 = vsel %vm546, %v666, %v665
      %v668 = vsub.s32 4, %v644
      %v669 = vsel %vm546, %v668, %v644
      %v670 = vsel %vm545, %v78, %v667
      %v671 = vsel %vm545, 0, %v669
      %v672 = vmul.f32 %v670, %v670
      %v673 = vmul.f32 %v672, -0.001358992
      %v674 = vadd.f32 %v673, 0.041655596
      %v675 = vmul.f32 %v672, %v674
      %v676 = vadd.f32 %v675, -0.4999988
      %v677 = vmul.f32 %v672, %v676
      %v678 = vadd.f32 1.0, %v677
      %v679 = vmul.f32 %v670, %v670
      %v680 = vmul.f32 %v679, -0.00019511016
      %v681 = vadd.f32 %v680, 0.008332121
      %v682 = vmul.f32 %v679, %v681
      %v683 = vadd.f32 %v682, -0.16666654
      %v684 = vmul.f32 %v679, %v683
      %v685 = vadd.f32 %v684, 1.0
      %v686 = vmul.f32 %v685, %v670
      %vm687 = vweird.f32 %v78
      %v688 = vand.u32 %v671, 3
      %vm689 = vcmp.lt.s32.totalorder %v688, 2
      %vm690 = vcmp.eq.s32.totalorder %v688, 0
      %v691 = vxor.u32 %v686, 2147483648
      %v692 = vsel %vm690, %v678, %v691
      %vm693 = vcmp.eq.s32.totalorder %v688, 2
      %v694 = vxor.u32 %v678, 2147483648
      %v695 = vsel %vm693, %v694, %v686
      %v696 = vsel %vm689, %v692, %v695
      %v697 = vsel %vm687, nan, %v696
      %v698 = vsel %vm79, 1, 0
      %v699 = vperm.slane %v698, 0
      %vm700 = vcmp.eq.s32.totalorder %v699, 1
      %v701 = vsel %vm700, %v234, %v543
      %v702 = vsel %vm700, %v389, %v697
      %v703 = vmul.f32 %v74, %v701
      %v704 = vmul.f32 %v75, %v702
      %vm705 = vcmask 130048
      %706 = vst.msk [vmem:[#allocation2] sm:$0xff] %vm705, %v703
      %707 = vst.msk [vmem:[#allocation2 + $0x8] sm:$0xff] %vm705, %v704
    $region21: #{tpu_custom_call.1} parent=1 // pred_fallthru
      _
    %v708 = vld [vmem:[#allocation2] sm:$0xff]
    %v709 = vld [vmem:[#allocation2 + $0x8] sm:$0xff]
    %v710 = vld [vmem:[#allocation6] sm:$0xff]
    %v711 = vld [vmem:[#allocation6 + $0x8] sm:$0xff]
    %vm712 = vcmask 130048
    %v714 = vsel %vm712, %v708, 0
    %v717 = vsel %vm712, %v709, 0
    %719 = vmatpush.msra.mxu0 0.0
    %720 = vmatpush.msra.mxu0 0.0
    %721 = vmatpush.msra.mxu0 0.0
    %722 = vmatpush.msra.mxu0 0.0
    %723 = vmatpush.msra.mxu0 0.0
    %724 = vmatpush.msra.mxu0 0.0
    %725 = vmatpush.msra.mxu0 0.0
    %726 = vmatpush.msra.mxu0 0.0
    %727 = vmatpush.msra.mxu0 0.0
    %728 = vmatpush.msra.mxu0 0.0
    %729 = vmatpush.msra.mxu0 0.0
    %730 = vmatpush.msra.mxu0 0.0
    %731 = vmatpush.msra.mxu0 0.0
    %732 = vmatpush.msra.mxu0 0.0
    %733 = vmatpush.msra.mxu0 %v711
    %734 = vmatpush.msra.mxu0 %v710
    %735 = vmatmul.f32.gmra.mxu0 %v714
    %v736 = vpop.f32.mrf.mxu0
    %v737 = vadd.f32 0.0, %v736
    %738 = vmatmul.f32.gmra.mxu0 %v717
    %v739 = vpop.f32.mrf.mxu0
    %v740 = vadd.f32 0.0, %v739
    %741 = vdwg.mxu0
    %742 = vst [vmem:[#allocation8] sm:$0xff] %v737
    %743 = vst [vmem:[#allocation8 + $0x8] sm:$0xff] %v740
    // Predicated region
    $region22: #{tpu_custom_call.1} parent=1 // pred_check
      _
    $region23: #{tpu_custom_call.1} parent=1 // pred_check_branch
      %745 = sbr.rel (0) target = $region25
    $region24: #{tpu_custom_call.1} parent=1 // pred_region
      %747 = vsyncadd [#allocation5], 0
      %s748 = sshll.u32 [#allocation8], 4
      %s749 = int_to_ptr.vmem [resolvable:$true] %s748
      %s750 = sshll.u32 %s2, 4
      %s751 = int_to_ptr.hbm [resolvable:$true] %s750
      %756 = dma.vmem_to_hbm [thread:$0]  %s749, 256, %s751, [#allocation5], 128, 128, 8
    $region25: #{tpu_custom_call.1} parent=1 // pred_fallthru
      _
    // Predicated region
    $region26: #{tpu_custom_call.1} parent=1 // pred_check
      _
    $region27: #{tpu_custom_call.1} parent=1 // pred_check_branch
      %758 = sbr.rel (0) target = $region29
    $region28: #{tpu_custom_call.1} parent=1 // pred_region
      %760 = dma.done [#allocation5], 256
    $region29: #{tpu_custom_call.1} parent=1 // pred_fallthru
      _
    %761 = vsyncpa [#allocation4], 1
    %762 = vsyncpa [#allocation7], 1
    %763 = vsyncpa [#allocation5], 1

</llo_original>
